<compile_context>
chip_gen: v6e
topology: v6e:2x2x1
jax: 0.10.0
libtpu: 0.0.40
codegen_flags: <defaults>
</compile_context>

<pallas_src>
import functools

import jax
import jax.numpy as jnp
from jax import lax
from jax.experimental import pallas as pl
from jax.experimental.pallas import tpu as pltpu


# ----------------------------- Pallas kernels ------------------------------ #

def _fused_conv_kernel(p3_ref, pl1_ref, p1l_ref,
                       w3_ref, b3_ref, wl1_ref, bl1_ref, w1l_ref, b1l_ref,
                       o3_ref, ol1_ref, o1l_ref):
    """One grid step = one image.  Three matmuls, bias + ReLU fused.

    Weights sit on the MXU row axis (small Cout), output pixels sit on lanes
    (H*W = 256 / 208 wide), so stores are unmasked and lane-dense.
    """
    o3_ref[0] = jnp.maximum(
        jnp.dot(w3_ref[...], p3_ref[0], preferred_element_type=jnp.float32)
        + b3_ref[...], 0.0)
    ol1_ref[0] = jnp.maximum(
        jnp.dot(wl1_ref[...], pl1_ref[0], preferred_element_type=jnp.float32)
        + bl1_ref[...], 0.0)
    o1l_ref[0] = jnp.maximum(
        jnp.dot(w1l_ref[...], p1l_ref[0], preferred_element_type=jnp.float32)
        + b1l_ref[...], 0.0)


def fused_conv_branches(pat3, patl1, pat1l, w3, b3, wl1, bl1, w1l, b1l):
    """All five conv branches in one pallas_call.

    pat3:  (N, 9*Cin, H*W)        transposed im2col for the 3x3/pad1 family
    patl1: (N, L*Cin, (H-L+1)*W)  transposed im2col for the (L,1) conv
    pat1l: (N, L*Cin, H*(W-L+1))  transposed im2col for the (1,L) conv
    w3:    (3*co, 9*Cin)  concat of [1x1-as-3x3, 3x3, pool-as-3x3] fused weights
    """
    N, K3, M3 = pat3.shape
    _, KL, ML1 = patl1.shape
    M1L = pat1l.shape[2]
    C3 = w3.shape[0]
    CL = wl1.shape[0]
    return pl.pallas_call(
        _fused_conv_kernel,
        out_shape=(
            jax.ShapeDtypeStruct((N, C3, M3), jnp.float32),
            jax.ShapeDtypeStruct((N, CL, ML1), jnp.float32),
            jax.ShapeDtypeStruct((N, CL, M1L), jnp.float32),
        ),
        grid=(N,),
        in_specs=[
            pl.BlockSpec((1, K3, M3), lambda n: (n, 0, 0)),
            pl.BlockSpec((1, KL, ML1), lambda n: (n, 0, 0)),
            pl.BlockSpec((1, KL, M1L), lambda n: (n, 0, 0)),
            pl.BlockSpec((C3, K3), lambda n: (0, 0)),   # resident fused weight
            pl.BlockSpec((C3, 1), lambda n: (0, 0)),    # resident fused bias
            pl.BlockSpec((CL, KL), lambda n: (0, 0)),
            pl.BlockSpec((CL, 1), lambda n: (0, 0)),
            pl.BlockSpec((CL, KL), lambda n: (0, 0)),
            pl.BlockSpec((CL, 1), lambda n: (0, 0)),
        ],
        out_specs=(
            pl.BlockSpec((1, C3, M3), lambda n: (n, 0, 0)),
            pl.BlockSpec((1, CL, ML1), lambda n: (n, 0, 0)),
            pl.BlockSpec((1, CL, M1L), lambda n: (n, 0, 0)),
        ),
        compiler_params=pltpu.CompilerParams(dimension_semantics=("parallel",)),
    )(pat3, patl1, pat1l, w3, b3, wl1, bl1, w1l, b1l)


def _lxl_kernel(a_ref, b_ref, o_ref):
    # Batched matmul over the channel block in a single dot_general — one MXU
    # pass per grid step instead of one grid step per (n, channel).
    o_ref[...] = lax.dot_general(
        a_ref[...], b_ref[...],
        dimension_numbers=(((2,), (1,)), ((0,), (0,))),
        preferred_element_type=jnp.float32)


def lxl_matmul(a, b, batch_block):
    """a: (B, M, K), b: (B, K, N) -> (B, M, N); `batch_block` batches per step."""
    B, M, K = a.shape
    Nn = b.shape[2]
    assert B % batch_block == 0
    return pl.pallas_call(
        _lxl_kernel,
        out_shape=jax.ShapeDtypeStruct((B, M, Nn), jnp.float32),
        grid=(B // batch_block,),
        in_specs=[
            pl.BlockSpec((batch_block, M, K), lambda i: (i, 0, 0)),
            pl.BlockSpec((batch_block, K, Nn), lambda i: (i, 0, 0)),
        ],
        out_specs=pl.BlockSpec((batch_block, M, Nn), lambda i: (i, 0, 0)),
        compiler_params=pltpu.CompilerParams(dimension_semantics=("parallel",)),
    )(a, b)


# ------------------------------ JAX glue code ------------------------------ #

def fuse_bn(w, b, gamma, beta, mean, var, eps=1e-5):
    scale = gamma / jnp.sqrt(var + eps)
    return w * scale[:, None, None, None], (b - mean) * scale + beta


def _w_to_mat(w):
    """(Cout, Cin, kh, kw) -> (Cout, kh*kw*Cin), matching the tap-major patches."""
    cout, cin, kh, kw = w.shape
    return jnp.transpose(w, (0, 2, 3, 1)).reshape(cout, kh * kw * cin)


def init_params(key, in_channels, out_channels, length):
    co = out_channels // 4

    def conv_bn(k, cin, cout, kh, kw):
        ks = jax.random.split(k, 6)
        return dict(
            w=0.1 * jax.random.normal(ks[0], (cout, cin, kh, kw), jnp.float32),
            b=0.05 * jax.random.normal(ks[1], (cout,), jnp.float32),
            gamma=1.0 + 0.1 * jax.random.normal(ks[2], (cout,), jnp.float32),
            beta=0.05 * jax.random.normal(ks[3], (cout,), jnp.float32),
            mean=0.05 * jax.random.normal(ks[4], (cout,), jnp.float32),
            var=1.0 + 0.1 * jnp.abs(jax.random.normal(ks[5], (cout,), jnp.float32)),
        )

    keys = jax.random.split(key, 5)
    return dict(
        b1x1=conv_bn(keys[0], in_channels, co, 1, 1),
        b3x3=conv_bn(keys[1], in_channels, co, 3, 3),
        bLx1=conv_bn(keys[2], in_channels, co, length, 1),
        b1xL=conv_bn(keys[3], in_channels, co, 1, length),
        bpool=conv_bn(keys[4], in_channels, co, 1, 1),
    )


def inception_block_forward(x_nchw, params, length):
    # API constraint: torch.matmul(branch1xL, branchLx1) requires H == W.
    N, Cin, H, W = x_nchw.shape
    assert H == W, "InceptionBlock requires square spatial dims (H == W)"
    L = length
    Ho = H - L + 1
    Wo = W - L + 1
    co = params["b1x1"]["w"].shape[0]

    # ---- fold BatchNorm (inference) into conv weights / biases ----
    w1, c1 = fuse_bn(**params["b1x1"])
    w3, c3 = fuse_bn(**params["b3x3"])
    wl1, cl1 = fuse_bn(**params["bLx1"])
    w1l, c1l = fuse_bn(**params["b1xL"])
    wp, cp = fuse_bn(**params["bpool"])

    # 1x1 conv == center-tap-only 3x3/pad1 conv;
    # avg_pool2d(3,1,1,count_include_pad=True) + 1x1 conv == uniform 3x3/pad1 conv.
    w1_as3 = jnp.zeros((co, Cin, 3, 3), jnp.float32).at[:, :, 1, 1].set(w1[:, :, 0, 0])
    wp_as3 = jnp.tile(wp / 9.0, (1, 1, 3, 3))
    w3_fused = jnp.concatenate([w1_as3, w3, wp_as3], axis=0)        # (3co, Cin, 3, 3)
    w3_mat = _w_to_mat(w3_fused)                                    # (3co, 9*Cin)
    b3_vec = jnp.concatenate([c1, c3, cp]).reshape(3 * co, 1)

    wl1_mat = jnp.transpose(wl1[:, :, :, 0], (0, 2, 1)).reshape(co, L * Cin)
    w1l_mat = jnp.transpose(w1l[:, :, 0, :], (0, 2, 1)).reshape(co, L * Cin)
    bl1_vec = cl1.reshape(co, 1)
    b1l_vec = c1l.reshape(co, 1)

    # ---- transposed im2col: rows = taps*Cin, lanes = output pixels ----
    xp = jnp.pad(x_nchw, ((0, 0), (0, 0), (1, 1), (1, 1)))
    pat3 = jnp.concatenate(
        [xp[:, :, dh:dh + H, dw:dw + W] for dh in range(3) for dw in range(3)],
        axis=1).reshape(N, 9 * Cin, H * W)
    patl1 = jnp.concatenate(
        [x_nchw[:, :, dh:dh + Ho, :] for dh in range(L)],
        axis=1).reshape(N, L * Cin, Ho * W)
    pat1l = jnp.concatenate(
        [x_nchw[:, :, :, dw:dw + Wo] for dw in range(L)],
        axis=1).reshape(N, L * Cin, H * Wo)

    # ---- all five conv+BN+ReLU branches in one Pallas call ----
    o3, ol1, o1l = fused_conv_branches(
        pat3, patl1, pat1l, w3_mat, b3_vec, wl1_mat, bl1_vec, w1l_mat, b1l_vec)

    # ---- branchLxL = matmul(branch1xL, branchLx1), batched over (n, channel) ----
    a = o1l.reshape(N * co, H, Wo)       # branch1xL, (N*co, H, W-L+1)
    bm = ol1.reshape(N * co, Ho, W)      # branchLx1, (N*co, H-L+1, W)
    branch_lxl = lxl_matmul(a, bm, batch_block=co).reshape(N, co, H, W)

    o3r = o3.reshape(N, 3 * co, H, W)    # [1x1, 3x3, pool] channel order
    return jnp.concatenate([o3r[:, :2 * co], branch_lxl, o3r[:, 2 * co:]], axis=1)


# ----------------------------- pure-JAX reference --------------------------- #

def _ref_forward(x, params, length):
    hi = lax.Precision.HIGHEST

    def conv_bn_relu(xx, p, padding):
        w, b = fuse_bn(p["w"], p["b"], p["gamma"], p["beta"], p["mean"], p["var"])
        y = lax.conv_general_dilated(
            xx, w, (1, 1), padding,
            dimension_numbers=("NCHW", "OIHW", "NCHW"), precision=hi)
        return jnp.maximum(y + b[None, :, None, None], 0.0)

    b1 = conv_bn_relu(x, params["b1x1"], "VALID")
    b3 = conv_bn_relu(x, params["b3x3"], ((1, 1), (1, 1)))
    bLx1 = conv_bn_relu(x, params["bLx1"], "VALID")
    b1xL = conv_bn_relu(x, params["b1xL"], "VALID")
    bLxL = jnp.matmul(b1xL, bLx1, precision=hi)
    xa = lax.reduce_window(
        x, 0.0, lax.add, (1, 1, 3, 3), (1, 1, 1, 1),
        ((0, 0), (0, 0), (1, 1), (1, 1))) / 9.0
    bp = conv_bn_relu(xa, params["bpool"], "VALID")
    return jnp.concatenate([b1, b3, bLxL, bp], axis=1)


# ---------------------------------- main ----------------------------------- #

if __name__ == "__main__":
    key = jax.random.PRNGKey(0)
    N, Cin, H, W = 2, 4, 16, 16
    out_channels, length = 8, 4

    kx, kp = jax.random.split(key)
    x = jax.random.normal(kx, (N, Cin, H, W), jnp.float32)
    params = init_params(kp, Cin, out_channels, length)

    fwd = jax.jit(functools.partial(inception_block_forward, length=length))
    out = fwd(x, params)
    jax.block_until_ready(out)

    assert out.shape == (N, out_channels, H, W), out.shape
    ref = _ref_forward(x, params, length)
    err = float(jnp.max(jnp.abs(out - ref)))
    assert jnp.allclose(out, ref, rtol=1e-2, atol=1e-2), f"max abs err {err}"

    print("KERNEL_OK")
</pallas_src>

<mosaic_0001>
module attributes {stable_mosaic.version = 11 : i64} {
  func.func @_lxl_kernel(%arg0: i32, %arg1: memref<2x16x13xf32, #tpu.memory_space<vmem>>, %arg2: memref<2x13x16xf32, #tpu.memory_space<vmem>>, %arg3: memref<2x16x16xf32, #tpu.memory_space<vmem>>) attributes {dimension_semantics = [#tpu.dimension_semantics<parallel>], iteration_bounds = array<i64: 2>, scalar_prefetch = 0 : i64, scratch_operands = 0 : i64, tpu.core_type = #tpu.core_type<tc>, window_params = [{transform_indices = @transform_0, window_bounds = array<i64: 2, 16, 13>}, {transform_indices = @transform_1, window_bounds = array<i64: 2, 13, 16>}, {transform_indices = @transform_2, window_bounds = array<i64: 2, 16, 16>}]} {
    %c0 = arith.constant 0 : index
    %c0_0 = arith.constant 0 : index
    %c0_1 = arith.constant 0 : index
    %0 = vector.load %arg1[%c0, %c0_0, %c0_1] : memref<2x16x13xf32, #tpu.memory_space<vmem>>, vector<2x16x13xf32>
    %c0_2 = arith.constant 0 : index
    %c0_3 = arith.constant 0 : index
    %c0_4 = arith.constant 0 : index
    %1 = vector.load %arg2[%c0_2, %c0_3, %c0_4] : memref<2x13x16xf32, #tpu.memory_space<vmem>>, vector<2x13x16xf32>
    %cst = arith.constant dense<0.000000e+00> : vector<2x16x16xf32>
    %2 = tpu.matmul %0, %1, %cst {dimension_numbers = #tpu.dot_dimension_numbers<[2], [1], [1], [2], [0, 0, 0, 1, 1, 2], [0], [0]>} : vector<2x16x13xf32>, vector<2x13x16xf32>, vector<2x16x16xf32> -> vector<2x16x16xf32>
    %c0_5 = arith.constant 0 : index
    %c0_6 = arith.constant 0 : index
    %c0_7 = arith.constant 0 : index
    %3 = vector.load %arg3[%c0_5, %c0_6, %c0_7] : memref<2x16x16xf32, #tpu.memory_space<vmem>>, vector<2x16x16xf32>
    tpu.vector_store %arg3[%c0_5, %c0_6, %c0_7], %2 {strides = array<i32>} : memref<2x16x16xf32, #tpu.memory_space<vmem>>, vector<2x16x16xf32>,
    return
  }
  func.func @transform_0(%arg0: i32) -> (i32, i32, i32) {
    %c0_i32 = arith.constant 0 : i32
    %c0_i32_0 = arith.constant 0 : i32
    %c0_i32_1 = arith.constant 0 : i32
    return %arg0, %c0_i32, %c0_i32_0 : i32, i32, i32
  }
  func.func @transform_1(%arg0: i32) -> (i32, i32, i32) {
    %c0_i32 = arith.constant 0 : i32
    %c0_i32_0 = arith.constant 0 : i32
    %c0_i32_1 = arith.constant 0 : i32
    return %arg0, %c0_i32, %c0_i32_0 : i32, i32, i32
  }
  func.func @transform_2(%arg0: i32) -> (i32, i32, i32) {
    %c0_i32 = arith.constant 0 : i32
    %c0_i32_0 = arith.constant 0 : i32
    %c0_i32_1 = arith.constant 0 : i32
    return %arg0, %c0_i32, %c0_i32_0 : i32, i32, i32
  }
}

module attributes {stable_mosaic.version = 11 : i64} {
  func.func @_fused_conv_kernel(%arg0: i32, %arg1: memref<1x36x256xf32, #tpu.memory_space<vmem>>, %arg2: memref<1x16x208xf32, #tpu.memory_space<vmem>>, %arg3: memref<1x16x208xf32, #tpu.memory_space<vmem>>, %arg4: memref<6x36xf32, #tpu.memory_space<vmem>>, %arg5: memref<6x1xf32, #tpu.memory_space<vmem>>, %arg6: memref<2x16xf32, #tpu.memory_space<vmem>>, %arg7: memref<2x1xf32, #tpu.memory_space<vmem>>, %arg8: memref<2x16xf32, #tpu.memory_space<vmem>>, %arg9: memref<2x1xf32, #tpu.memory_space<vmem>>, %arg10: memref<1x6x256xf32, #tpu.memory_space<vmem>>, %arg11: memref<1x2x208xf32, #tpu.memory_space<vmem>>, %arg12: memref<1x2x208xf32, #tpu.memory_space<vmem>>) attributes {dimension_semantics = [#tpu.dimension_semantics<parallel>], iteration_bounds = array<i64: 2>, scalar_prefetch = 0 : i64, scratch_operands = 0 : i64, tpu.core_type = #tpu.core_type<tc>, window_params = [{transform_indices = @transform_0, window_bounds = array<i64: 1, 36, 256>}, {transform_indices = @transform_1, window_bounds = array<i64: 1, 16, 208>}, {transform_indices = @transform_2, window_bounds = array<i64: 1, 16, 208>}, {pipeline_mode = #tpu.pipeline_mode<synchronous>, transform_indices = @transform_3, window_bounds = array<i64: 6, 36>}, {pipeline_mode = #tpu.pipeline_mode<synchronous>, transform_indices = @transform_4, window_bounds = array<i64: 6, 1>}, {pipeline_mode = #tpu.pipeline_mode<synchronous>, transform_indices = @transform_5, window_bounds = array<i64: 2, 16>}, {pipeline_mode = #tpu.pipeline_mode<synchronous>, transform_indices = @transform_6, window_bounds = array<i64: 2, 1>}, {pipeline_mode = #tpu.pipeline_mode<synchronous>, transform_indices = @transform_7, window_bounds = array<i64: 2, 16>}, {pipeline_mode = #tpu.pipeline_mode<synchronous>, transform_indices = @transform_8, window_bounds = array<i64: 2, 1>}, {transform_indices = @transform_9, window_bounds = array<i64: 1, 6, 256>}, {transform_indices = @transform_10, window_bounds = array<i64: 1, 2, 208>}, {transform_indices = @transform_11, window_bounds = array<i64: 1, 2, 208>}]} {
    %c0 = arith.constant 0 : index
    %c0_0 = arith.constant 0 : index
    %0 = vector.load %arg4[%c0, %c0_0] : memref<6x36xf32, #tpu.memory_space<vmem>>, vector<6x36xf32>
    %c0_1 = arith.constant 0 : index
    %c0_2 = arith.constant 0 : index
    %c0_3 = arith.constant 0 : index
    %1 = vector.load %arg1[%c0_1, %c0_2, %c0_3] : memref<1x36x256xf32, #tpu.memory_space<vmem>>, vector<1x36x256xf32>
    %2 = vector.shape_cast %1 : vector<1x36x256xf32> to vector<36x256xf32>
    %cst = arith.constant dense<0.000000e+00> : vector<6x256xf32>
    %3 = tpu.matmul %0, %2, %cst {dimension_numbers = #tpu.dot_dimension_numbers<[1], [0], [0], [1], [0, 0, 1, 1], [], []>} : vector<6x36xf32>, vector<36x256xf32>, vector<6x256xf32> -> vector<6x256xf32>
    %c0_4 = arith.constant 0 : index
    %c0_5 = arith.constant 0 : index
    %4 = vector.load %arg5[%c0_4, %c0_5] : memref<6x1xf32, #tpu.memory_space<vmem>>, vector<6x1xf32>
    %5 = vector.broadcast %4 : vector<6x1xf32> to vector<6x256xf32>
    %6 = arith.addf %3, %5 : vector<6x256xf32>
    %cst_6 = arith.constant 0.000000e+00 : f32
    %7 = vector.broadcast %cst_6 : f32 to vector<6x256xf32>
    %8 = arith.maximumf %6, %7 : vector<6x256xf32>
    %c0_7 = arith.constant 0 : index
    %c0_8 = arith.constant 0 : index
    %c0_9 = arith.constant 0 : index
    %9 = vector.load %arg10[%c0_7, %c0_8, %c0_9] : memref<1x6x256xf32, #tpu.memory_space<vmem>>, vector<1x6x256xf32>
    %10 = vector.shape_cast %9 : vector<1x6x256xf32> to vector<6x256xf32>
    %11 = vector.shape_cast %8 : vector<6x256xf32> to vector<1x6x256xf32>
    tpu.vector_store %arg10[%c0_7, %c0_8, %c0_9], %11 {strides = array<i32>} : memref<1x6x256xf32, #tpu.memory_space<vmem>>, vector<1x6x256xf32>,
    %c0_10 = arith.constant 0 : index
    %c0_11 = arith.constant 0 : index
    %12 = vector.load %arg6[%c0_10, %c0_11] : memref<2x16xf32, #tpu.memory_space<vmem>>, vector<2x16xf32>
    %c0_12 = arith.constant 0 : index
    %c0_13 = arith.constant 0 : index
    %c0_14 = arith.constant 0 : index
    %13 = vector.load %arg2[%c0_12, %c0_13, %c0_14] : memref<1x16x208xf32, #tpu.memory_space<vmem>>, vector<1x16x208xf32>
    %14 = vector.shape_cast %13 : vector<1x16x208xf32> to vector<16x208xf32>
    %cst_15 = arith.constant dense<0.000000e+00> : vector<2x208xf32>
    %15 = tpu.matmul %12, %14, %cst_15 {dimension_numbers = #tpu.dot_dimension_numbers<[1], [0], [0], [1], [0, 0, 1, 1], [], []>} : vector<2x16xf32>, vector<16x208xf32>, vector<2x208xf32> -> vector<2x208xf32>
    %c0_16 = arith.constant 0 : index
    %c0_17 = arith.constant 0 : index
    %16 = vector.load %arg7[%c0_16, %c0_17] : memref<2x1xf32, #tpu.memory_space<vmem>>, vector<2x1xf32>
    %17 = vector.broadcast %16 : vector<2x1xf32> to vector<2x208xf32>
    %18 = arith.addf %15, %17 : vector<2x208xf32>
    %cst_18 = arith.constant 0.000000e+00 : f32
    %19 = vector.broadcast %cst_18 : f32 to vector<2x208xf32>
    %20 = arith.maximumf %18, %19 : vector<2x208xf32>
    %c0_19 = arith.constant 0 : index
    %c0_20 = arith.constant 0 : index
    %c0_21 = arith.constant 0 : index
    %21 = vector.load %arg11[%c0_19, %c0_20, %c0_21] : memref<1x2x208xf32, #tpu.memory_space<vmem>>, vector<1x2x208xf32>
    %22 = vector.shape_cast %21 : vector<1x2x208xf32> to vector<2x208xf32>
    %23 = vector.shape_cast %20 : vector<2x208xf32> to vector<1x2x208xf32>
    tpu.vector_store %arg11[%c0_19, %c0_20, %c0_21], %23 {strides = array<i32>} : memref<1x2x208xf32, #tpu.memory_space<vmem>>, vector<1x2x208xf32>,
    %c0_22 = arith.constant 0 : index
    %c0_23 = arith.constant 0 : index
    %24 = vector.load %arg8[%c0_22, %c0_23] : memref<2x16xf32, #tpu.memory_space<vmem>>, vector<2x16xf32>
    %c0_24 = arith.constant 0 : index
    %c0_25 = arith.constant 0 : index
    %c0_26 = arith.constant 0 : index
    %25 = vector.load %arg3[%c0_24, %c0_25, %c0_26] : memref<1x16x208xf32, #tpu.memory_space<vmem>>, vector<1x16x208xf32>
    %26 = vector.shape_cast %25 : vector<1x16x208xf32> to vector<16x208xf32>
    %cst_27 = arith.constant dense<0.000000e+00> : vector<2x208xf32>
    %27 = tpu.matmul %24, %26, %cst_27 {dimension_numbers = #tpu.dot_dimension_numbers<[1], [0], [0], [1], [0, 0, 1, 1], [], []>} : vector<2x16xf32>, vector<16x208xf32>, vector<2x208xf32> -> vector<2x208xf32>
    %c0_28 = arith.constant 0 : index
    %c0_29 = arith.constant 0 : index
    %28 = vector.load %arg9[%c0_28, %c0_29] : memref<2x1xf32, #tpu.memory_space<vmem>>, vector<2x1xf32>
    %29 = vector.broadcast %28 : vector<2x1xf32> to vector<2x208xf32>
    %30 = arith.addf %27, %29 : vector<2x208xf32>
    %cst_30 = arith.constant 0.000000e+00 : f32
    %31 = vector.broadcast %cst_30 : f32 to vector<2x208xf32>
    %32 = arith.maximumf %30, %31 : vector<2x208xf32>
    %c0_31 = arith.constant 0 : index
    %c0_32 = arith.constant 0 : index
    %c0_33 = arith.constant 0 : index
    %33 = vector.load %arg12[%c0_31, %c0_32, %c0_33] : memref<1x2x208xf32, #tpu.memory_space<vmem>>, vector<1x2x208xf32>
    %34 = vector.shape_cast %33 : vector<1x2x208xf32> to vector<2x208xf32>
    %35 = vector.shape_cast %32 : vector<2x208xf32> to vector<1x2x208xf32>
    tpu.vector_store %arg12[%c0_31, %c0_32, %c0_33], %35 {strides = array<i32>} : memref<1x2x208xf32, #tpu.memory_space<vmem>>, vector<1x2x208xf32>,
    return
  }
  func.func @transform_0(%arg0: i32) -> (i32, i32, i32) {
    %c0_i32 = arith.constant 0 : i32
    %c0_i32_0 = arith.constant 0 : i32
    %c0_i32_1 = arith.constant 0 : i32
    return %arg0, %c0_i32, %c0_i32_0 : i32, i32, i32
  }
  func.func @transform_1(%arg0: i32) -> (i32, i32, i32) {
    %c0_i32 = arith.constant 0 : i32
    %c0_i32_0 = arith.constant 0 : i32
    %c0_i32_1 = arith.constant 0 : i32
    return %arg0, %c0_i32, %c0_i32_0 : i32, i32, i32
  }
  func.func @transform_2(%arg0: i32) -> (i32, i32, i32) {
    %c0_i32 = arith.constant 0 : i32
    %c0_i32_0 = arith.constant 0 : i32
    %c0_i32_1 = arith.constant 0 : i32
    return %arg0, %c0_i32, %c0_i32_0 : i32, i32, i32
  }
  func.func @transform_3(%arg0: i32) -> (i32, i32) {
    %c0_i32 = arith.constant 0 : i32
    %c0_i32_0 = arith.constant 0 : i32
    %c0_i32_1 = arith.constant 0 : i32
    return %c0_i32, %c0_i32_0 : i32, i32
  }
  func.func @transform_4(%arg0: i32) -> (i32, i32) {
    %c0_i32 = arith.constant 0 : i32
    %c0_i32_0 = arith.constant 0 : i32
    %c0_i32_1 = arith.constant 0 : i32
    return %c0_i32, %c0_i32_0 : i32, i32
  }
  func.func @transform_5(%arg0: i32) -> (i32, i32) {
    %c0_i32 = arith.constant 0 : i32
    %c0_i32_0 = arith.constant 0 : i32
    %c0_i32_1 = arith.constant 0 : i32
    return %c0_i32, %c0_i32_0 : i32, i32
  }
  func.func @transform_6(%arg0: i32) -> (i32, i32) {
    %c0_i32 = arith.constant 0 : i32
    %c0_i32_0 = arith.constant 0 : i32
    %c0_i32_1 = arith.constant 0 : i32
    return %c0_i32, %c0_i32_0 : i32, i32
  }
  func.func @transform_7(%arg0: i32) -> (i32, i32) {
    %c0_i32 = arith.constant 0 : i32
    %c0_i32_0 = arith.constant 0 : i32
    %c0_i32_1 = arith.constant 0 : i32
    return %c0_i32, %c0_i32_0 : i32, i32
  }
  func.func @transform_8(%arg0: i32) -> (i32, i32) {
    %c0_i32 = arith.constant 0 : i32
    %c0_i32_0 = arith.constant 0 : i32
    %c0_i32_1 = arith.constant 0 : i32
    return %c0_i32, %c0_i32_0 : i32, i32
  }
  func.func @transform_9(%arg0: i32) -> (i32, i32, i32) {
    %c0_i32 = arith.constant 0 : i32
    %c0_i32_0 = arith.constant 0 : i32
    %c0_i32_1 = arith.constant 0 : i32
    return %arg0, %c0_i32, %c0_i32_0 : i32, i32, i32
  }
  func.func @transform_10(%arg0: i32) -> (i32, i32, i32) {
    %c0_i32 = arith.constant 0 : i32
    %c0_i32_0 = arith.constant 0 : i32
    %c0_i32_1 = arith.constant 0 : i32
    return %arg0, %c0_i32, %c0_i32_0 : i32, i32, i32
  }
  func.func @transform_11(%arg0: i32) -> (i32, i32, i32) {
    %c0_i32 = arith.constant 0 : i32
    %c0_i32_0 = arith.constant 0 : i32
    %c0_i32_1 = arith.constant 0 : i32
    return %arg0, %c0_i32, %c0_i32_0 : i32, i32, i32
  }
}

</mosaic_0001>

<llo_original>
// kernel: inception_block_forward.3
$region0: #{inception_block_forward.3}
  #allocation0 [shape = 'u32[]', space=smem, size = 0x4, offset = 0x4, fixed_abs, tag = 'smem constant byte address 0x4 - core index']
  #allocation1 [shape = 'u32[144,128]{1,0:T(1,128)}', space=vmem, size = 0x12000, scoped, tag = 'internal scratch']
  %s0 = inlined_call_operand.vmem [shape: f32[4,16,13], index: 0, kind: input, shape index: {}]
  %s1 = inlined_call_operand.vmem [shape: f32[4,13,16], index: 1, kind: input, shape index: {}]
  %s2 = inlined_call_operand.vmem [shape: f32[4,16,16], index: 2, kind: output, shape index: {}]
  %s3 = sld [smem:[#allocation0]]
  $region41: #{inception_block_forward.3} parent=0
    _
  %s5 = ssub.s32 1, %s3
  %s6 = scalar_select 0, %s5, %s3
  loop: start=0, step=1, limit=4
  $region2: #{inception_block_forward.3} parent=0 // loop_pre_header
    _
  $region3: #{inception_block_forward.3} parent=0 // loop_header
    %s8 = sphi 0, %s12
    %p9 = scmp.ge.s32.totalorder %s8, 4
    %s18 = sphi 0, %s20
    %s21 = sphi 0, %s18
    %s22 = sphi 0, %s21
    %s38 = sphi 0, %s22
    %s44 = sphi 0, %s46
    %s47 = sphi 0, %s44
    %s48 = sphi 0, %s47
    %s64 = sphi 0, %s48
    %s70 = sphi 0, %s72
    %s73 = sphi 0, %s70
    %s74 = sphi 0, %s73
    %s90 = sphi 0, %s74
  $region4: #{inception_block_forward.3} parent=0 // loop_header_branch
    %11 = sbr.rel (%p9) target = $region8
  $region5: #{inception_block_forward.3} parent=0 // loop_body
    %s13 = ssub.s32 %s8, 1
    %s14 = ssub.s32 %s8, 2
    %s15 = sadd.s32 %s8, 1
    %s16 = ssub.s32 %s8, %s15
    %p17 = scmp.eq.s32.totalorder %s16, 0
    %s19 = sadd.s32 %s18, 1
    %s20 = scalar_select %p17, %s18, %s19
    %p23 = pneg %p17
    %p24 = scmp.eq.s32.totalorder %s8, 1
    %p25 = por %p23, %p24
    %p26 = scmp.ne.s32.totalorder %s18, %s21
    %p27 = scmp.eq.s32.totalorder %s8, 0
    %p28 = por %p26, %p27
    %p29 = scmp.ne.s32.totalorder %s18, %s21
    %p30 = scmp.eq.s32.totalorder %s13, 1
    %p31 = por %p29, %p30
    %p32 = scmp.ne.s32.totalorder %s21, %s22
    %p33 = scmp.eq.s32.totalorder %s13, 0
    %p34 = por %p32, %p33
    %p35 = scmp.ne.s32.totalorder %s21, %s22
    %p36 = scmp.eq.s32.totalorder %s14, 1
    %p37 = por %p35, %p36
    %p39 = scmp.ne.s32.totalorder %s22, %s38
    %p40 = scmp.eq.s32.totalorder %s14, 0
    %p41 = por %p39, %p40
    %s42 = ssub.s32 %s8, %s15
    %p43 = scmp.eq.s32.totalorder %s42, 0
    %s45 = sadd.s32 %s44, 1
    %s46 = scalar_select %p43, %s44, %s45
    %p49 = pneg %p43
    %p50 = scmp.eq.s32.totalorder %s8, 1
    %p51 = por %p49, %p50
    %p52 = scmp.ne.s32.totalorder %s44, %s47
    %p53 = scmp.eq.s32.totalorder %s8, 0
    %p54 = por %p52, %p53
    %p55 = scmp.ne.s32.totalorder %s44, %s47
    %p56 = scmp.eq.s32.totalorder %s13, 1
    %p57 = por %p55, %p56
    %p58 = scmp.ne.s32.totalorder %s47, %s48
    %p59 = scmp.eq.s32.totalorder %s13, 0
    %p60 = por %p58, %p59
    %p61 = scmp.ne.s32.totalorder %s47, %s48
    %p62 = scmp.eq.s32.totalorder %s14, 1
    %p63 = por %p61, %p62
    %p65 = scmp.ne.s32.totalorder %s48, %s64
    %p66 = scmp.eq.s32.totalorder %s14, 0
    %p67 = por %p65, %p66
    %s68 = ssub.s32 %s8, %s15
    %p69 = scmp.eq.s32.totalorder %s68, 0
    %s71 = sadd.s32 %s70, 1
    %s72 = scalar_select %p69, %s70, %s71
    %p75 = pneg %p69
    %p76 = scmp.eq.s32.totalorder %s8, 1
    %p77 = por %p75, %p76
    %p78 = scmp.ne.s32.totalorder %s70, %s73
    %p79 = scmp.eq.s32.totalorder %s8, 0
    %p80 = por %p78, %p79
    %p81 = scmp.ne.s32.totalorder %s70, %s73
    %p82 = scmp.eq.s32.totalorder %s13, 1
    %p83 = por %p81, %p82
    %p84 = scmp.ne.s32.totalorder %s73, %s74
    %p85 = scmp.eq.s32.totalorder %s13, 0
    %p86 = por %p84, %p85
    %p87 = scmp.ne.s32.totalorder %s73, %s74
    %p88 = scmp.eq.s32.totalorder %s14, 1
    %p89 = por %p87, %p88
    %p91 = scmp.ne.s32.totalorder %s74, %s90
    %p92 = scmp.eq.s32.totalorder %s14, 0
    %p93 = por %p91, %p92
    %p94 = scmp.le.s32.totalorder 1, %s8
    %p95 = scmp.lt.s32.totalorder %s8, 3
    %p96 = pnand %p94, %p95
    %p97 = pneg %p96
    // Predicated region
    $region9: #{inception_block_forward.3} parent=5 // pred_check
      _
    $region10: #{inception_block_forward.3} parent=5 // pred_check_branch
      %99 = sbr.rel (%p96) target = $region12
    $region11: #{inception_block_forward.3} parent=5 // pred_region
      %s100 = ssub.s32 %s8, 1
    $region12: #{inception_block_forward.3} parent=5 // pred_fallthru
      _
    %p101 = scmp.lt.s32.totalorder %s8, 2
    // Predicated region
    $region13: #{inception_block_forward.3} parent=5 // pred_check
      %p102 = pneg %p101
    $region14: #{inception_block_forward.3} parent=5 // pred_check_branch
      %104 = sbr.rel (%p102) target = $region16
    $region15: #{inception_block_forward.3} parent=5 // pred_region
      // Predicated region
      $region17: #{inception_block_forward.3} parent=15 // pred_check
        %p105 = pneg %p28
      $region18: #{inception_block_forward.3} parent=15 // pred_check_branch
        %107 = sbr.rel (%p105) target = $region20
      $region19: #{inception_block_forward.3} parent=15 // pred_region
        %s108 = smul.u32 2, %s8
        %p109 = scmp.lt.s32.totalorder %s108, 3
        %s110 = scalar_select %p109, %s108, 3
        %s111 = smul.addr %s110, 2
        %s112 = smul.addr %s111, 8
        %s113 = scalar_lea.vmem %s0, %s112
        %s114 = smul.u32 2, %s8
      $region20: #{inception_block_forward.3} parent=15 // pred_fallthru
        _
      // Predicated region
      $region21: #{inception_block_forward.3} parent=15 // pred_check
        %p115 = pneg %p54
      $region22: #{inception_block_forward.3} parent=15 // pred_check_branch
        %117 = sbr.rel (%p115) target = $region24
      $region23: #{inception_block_forward.3} parent=15 // pred_region
        %s118 = smul.u32 2, %s8
        %p119 = scmp.lt.s32.totalorder %s118, 3
        %s120 = scalar_select %p119, %s118, 3
        %s121 = smul.addr %s120, 2
        %s122 = smul.addr %s121, 8
        %s123 = scalar_lea.vmem %s1, %s122
        %s124 = smul.u32 2, %s8
      $region24: #{inception_block_forward.3} parent=15 // pred_fallthru
        _
    $region16: #{inception_block_forward.3} parent=5 // pred_fallthru
      _
    %p125 = scmp.le.s32.totalorder 1, %s8
    %p126 = scmp.lt.s32.totalorder %s8, 3
    %p127 = pnand %p125, %p126
    %p128 = pneg %p127
    // Predicated region
    $region25: #{inception_block_forward.3} parent=5 // pred_check
      _
    $region26: #{inception_block_forward.3} parent=5 // pred_check_branch
      %130 = sbr.rel (%p127) target = $region28
    $region27: #{inception_block_forward.3} parent=5 // pred_region
      %s131 = ssub.s32 %s8, 1
      %s132 = smul.u32 2, %s13
      %p133 = scmp.lt.s32.totalorder %s132, 3
      %s134 = scalar_select %p133, %s132, 3
      %s135 = smul.addr %s134, 2
      %s136 = smul.addr %s135, 8
      %s137 = scalar_lea.vmem %s0, %s136
      %p138 = pneg %p34
      %p139 = pneg %p31
      %s140 = smul.u32 2, %s13
      %p141 = scmp.lt.s32.totalorder %s140, 3
      %s142 = scalar_select %p141, %s140, 3
      %s143 = smul.addr %s142, 2
      %s144 = smul.addr %s143, 8
      %s145 = scalar_lea.vmem %s1, %s144
      %p146 = pneg %p60
      %p147 = pneg %p57
      %p148 = pneg %p86
      %p149 = pneg %p83
      %s150 = smul.u32 2, %s13
      %p151 = scmp.lt.s32.totalorder %s150, 3
      %s152 = scalar_select %p151, %s150, 3
      %s153 = smul.addr %s152, 2
      %s154 = smul.addr %s153, 8
      %s155 = scalar_lea.vmem %s2, %s154
      %s156 = smul.u32 2, %s13
      %p157 = scmp.lt.s32.totalorder %s156, 3
      %s158 = scalar_select %p157, %s156, 3
      %s159 = smul.addr %s158, 2
      %s160 = smul.addr %s159, 8
      %s161 = scalar_lea.vmem %s0, %s160
      %s162 = smul.u32 2, %s13
      %s163 = smul.u32 2, %s13
      %p164 = scmp.lt.s32.totalorder %s163, 3
      %s165 = scalar_select %p164, %s163, 3
      %s166 = smul.addr %s165, 2
      %s167 = smul.addr %s166, 8
      %s168 = scalar_lea.vmem %s1, %s167
      %s169 = smul.u32 2, %s13
      %s170 = smul.u32 2, %s13
      %p171 = scmp.lt.s32.totalorder %s170, 3
      %s172 = scalar_select %p171, %s170, 3
      %s173 = smul.addr %s172, 2
      %s174 = smul.addr %s173, 8
      %s175 = scalar_lea.vmem %s2, %s174
      %s176 = smul.u32 2, %s13
      %v177 = vld [vmem:[%s161] sm:$0xff]
      %v178 = vld [vmem:[%s161 + $0x8] sm:$0xff]
      %v179 = vld [vmem:[%s161 + $0x10] sm:$0xff]
      %v180 = vld [vmem:[%s161 + $0x18] sm:$0xff]
      %v181 = vld [vmem:[%s168] sm:$0xff]
      %v182 = vld [vmem:[%s168 + $0x8] sm:$0x1f]
      %v183 = vld [vmem:[%s168 + $0x10] sm:$0xff]
      %v184 = vld [vmem:[%s168 + $0x18] sm:$0x1f]
      %vm185 = vcmask 105472
      %v187 = vsel %vm185, %v177, 0
      %v190 = vsel %vm185, %v178, 0
      %vm192 = vcmask 1044480
      %v194 = vsel %vm192, %v182, 0
      %196 = vmatprep.subr.mxu0 0.0
      %197 = vmatpush1.msra.mxu0 0.0
      %198 = vmatprep.subr.mxu0 0.0
      %199 = vmatpush1.msra.mxu0 0.0
      %200 = vmatprep.subr.mxu0 0.0
      %201 = vmatpush1.msra.mxu0 0.0
      %202 = vmatprep.subr.mxu0 0.0
      %203 = vmatpush1.msra.mxu0 0.0
      %204 = vmatprep.subr.mxu0 0.0
      %205 = vmatpush1.msra.mxu0 0.0
      %206 = vmatprep.subr.mxu0 0.0
      %207 = vmatpush1.msra.mxu0 0.0
      %208 = vmatprep.subr.mxu0 0.0
      %209 = vmatpush1.msra.mxu0 0.0
      %210 = vmatprep.subr.mxu0 0.0
      %211 = vmatpush1.msra.mxu0 0.0
      %212 = vmatprep.subr.mxu0 0.0
      %213 = vmatpush1.msra.mxu0 0.0
      %214 = vmatprep.subr.mxu0 0.0
      %215 = vmatpush1.msra.mxu0 0.0
      %216 = vmatprep.subr.mxu0 0.0
      %217 = vmatpush1.msra.mxu0 0.0
      %218 = vmatprep.subr.mxu0 0.0
      %219 = vmatpush1.msra.mxu0 0.0
      %220 = vmatprep.subr.mxu0 0.0
      %221 = vmatpush1.msra.mxu0 0.0
      %222 = vmatprep.subr.mxu0 0.0
      %223 = vmatpush1.msra.mxu0 0.0
      %224 = vmatprep.subr.mxu0 0.0
      %225 = vmatpush1.msra.mxu0 %v194
      %226 = vmatprep.subr.mxu0 0.0
      %227 = vmatpush1.msra.mxu0 %v181
      %228 = vmatprep.subr.mxu0 0.0
      %229 = vmatpush2.msra.mxu0 0.0
      %230 = vmatprep.subr.mxu0 0.0
      %231 = vmatpush2.msra.mxu0 0.0
      %232 = vmatprep.subr.mxu0 0.0
      %233 = vmatpush2.msra.mxu0 0.0
      %234 = vmatprep.subr.mxu0 0.0
      %235 = vmatpush2.msra.mxu0 0.0
      %236 = vmatprep.subr.mxu0 0.0
      %237 = vmatpush2.msra.mxu0 0.0
      %238 = vmatprep.subr.mxu0 0.0
      %239 = vmatpush2.msra.mxu0 0.0
      %240 = vmatprep.subr.mxu0 0.0
      %241 = vmatpush2.msra.mxu0 0.0
      %242 = vmatprep.subr.mxu0 0.0
      %243 = vmatpush2.msra.mxu0 0.0
      %244 = vmatprep.subr.mxu0 0.0
      %245 = vmatpush2.msra.mxu0 0.0
      %246 = vmatprep.subr.mxu0 0.0
      %247 = vmatpush2.msra.mxu0 0.0
      %248 = vmatprep.subr.mxu0 0.0
      %249 = vmatpush2.msra.mxu0 0.0
      %250 = vmatprep.subr.mxu0 0.0
      %251 = vmatpush2.msra.mxu0 0.0
      %252 = vmatprep.subr.mxu0 0.0
      %253 = vmatpush2.msra.mxu0 0.0
      %254 = vmatprep.subr.mxu0 0.0
      %255 = vmatpush2.msra.mxu0 0.0
      %256 = vmatprep.subr.mxu0 0.0
      %257 = vmatpush2.msra.mxu0 0.0
      %258 = vmatprep.subr.mxu0 0.0
      %259 = vmatpush2.msra.mxu0 0.0
      %260 = vmatprep.mubr.f32.mxu0 0.0
      %261 = vmatmul.mubr.f32.gmra.mxu0 %v187
      %v262 = vpop.f32.mrf.mxu0
      %v263 = vadd.f32 0.0, %v262
      %v264 = vpop.f32.mrf.mxu0
      %265 = vmatprep.mubr.f32.mxu0 0.0
      %266 = vmatmul.mubr.f32.gmra.mxu0 %v190
      %v267 = vpop.f32.mrf.mxu0
      %v268 = vadd.f32 0.0, %v267
      %v269 = vpop.f32.mrf.mxu0
      %270 = vdwg.mxu0
      %v272 = vsel %vm185, %v179, 0
      %v275 = vsel %vm185, %v180, 0
      %v278 = vsel %vm192, %v184, 0
      %280 = vmatprep.subr.mxu0 0.0
      %281 = vmatpush1.msra.mxu0 0.0
      %282 = vmatprep.subr.mxu0 0.0
      %283 = vmatpush1.msra.mxu0 0.0
      %284 = vmatprep.subr.mxu0 0.0
      %285 = vmatpush1.msra.mxu0 0.0
      %286 = vmatprep.subr.mxu0 0.0
      %287 = vmatpush1.msra.mxu0 0.0
      %288 = vmatprep.subr.mxu0 0.0
      %289 = vmatpush1.msra.mxu0 0.0
      %290 = vmatprep.subr.mxu0 0.0
      %291 = vmatpush1.msra.mxu0 0.0
      %292 = vmatprep.subr.mxu0 0.0
      %293 = vmatpush1.msra.mxu0 0.0
      %294 = vmatprep.subr.mxu0 0.0
      %295 = vmatpush1.msra.mxu0 0.0
      %296 = vmatprep.subr.mxu0 0.0
      %297 = vmatpush1.msra.mxu0 0.0
      %298 = vmatprep.subr.mxu0 0.0
      %299 = vmatpush1.msra.mxu0 0.0
      %300 = vmatprep.subr.mxu0 0.0
      %301 = vmatpush1.msra.mxu0 0.0
      %302 = vmatprep.subr.mxu0 0.0
      %303 = vmatpush1.msra.mxu0 0.0
      %304 = vmatprep.subr.mxu0 0.0
      %305 = vmatpush1.msra.mxu0 0.0
      %306 = vmatprep.subr.mxu0 0.0
      %307 = vmatpush1.msra.mxu0 0.0
      %308 = vmatprep.subr.mxu0 0.0
      %309 = vmatpush1.msra.mxu0 %v278
      %310 = vmatprep.subr.mxu0 0.0
      %311 = vmatpush1.msra.mxu0 %v183
      %312 = vmatprep.subr.mxu0 0.0
      %313 = vmatpush2.msra.mxu0 0.0
      %314 = vmatprep.subr.mxu0 0.0
      %315 = vmatpush2.msra.mxu0 0.0
      %316 = vmatprep.subr.mxu0 0.0
      %317 = vmatpush2.msra.mxu0 0.0
      %318 = vmatprep.subr.mxu0 0.0
      %319 = vmatpush2.msra.mxu0 0.0
      %320 = vmatprep.subr.mxu0 0.0
      %321 = vmatpush2.msra.mxu0 0.0
      %322 = vmatprep.subr.mxu0 0.0
      %323 = vmatpush2.msra.mxu0 0.0
      %324 = vmatprep.subr.mxu0 0.0
      %325 = vmatpush2.msra.mxu0 0.0
      %326 = vmatprep.subr.mxu0 0.0
      %327 = vmatpush2.msra.mxu0 0.0
      %328 = vmatprep.subr.mxu0 0.0
      %329 = vmatpush2.msra.mxu0 0.0
      %330 = vmatprep.subr.mxu0 0.0
      %331 = vmatpush2.msra.mxu0 0.0
      %332 = vmatprep.subr.mxu0 0.0
      %333 = vmatpush2.msra.mxu0 0.0
      %334 = vmatprep.subr.mxu0 0.0
      %335 = vmatpush2.msra.mxu0 0.0
      %336 = vmatprep.subr.mxu0 0.0
      %337 = vmatpush2.msra.mxu0 0.0
      %338 = vmatprep.subr.mxu0 0.0
      %339 = vmatpush2.msra.mxu0 0.0
      %340 = vmatprep.subr.mxu0 0.0
      %341 = vmatpush2.msra.mxu0 0.0
      %342 = vmatprep.subr.mxu0 0.0
      %343 = vmatpush2.msra.mxu0 0.0
      %344 = vmatprep.mubr.f32.mxu0 0.0
      %345 = vmatmul.mubr.f32.gmra.mxu0 %v272
      %v346 = vpop.f32.mrf.mxu0
      %v347 = vadd.f32 0.0, %v346
      %v348 = vpop.f32.mrf.mxu0
      %349 = vmatprep.mubr.f32.mxu0 0.0
      %350 = vmatmul.mubr.f32.gmra.mxu0 %v275
      %v351 = vpop.f32.mrf.mxu0
      %v352 = vadd.f32 0.0, %v351
      %v353 = vpop.f32.mrf.mxu0
      %354 = vdwg.mxu0
      %vm355 = vcmask 130048
      %356 = vst.msk [vmem:[%s175] sm:$0xff] %vm355, %v263
      %357 = vst.msk [vmem:[%s175 + $0x8] sm:$0xff] %vm355, %v268
      %358 = vst.msk [vmem:[%s175 + $0x10] sm:$0xff] %vm355, %v347
      %359 = vst.msk [vmem:[%s175 + $0x18] sm:$0xff] %vm355, %v352
      %s360 = smul.u32 2, %s13
      %p361 = scmp.lt.s32.totalorder %s360, 3
      %s362 = scalar_select %p361, %s360, 3
      %s363 = smul.addr %s362, 2
      %s364 = smul.addr %s363, 8
      %s365 = scalar_lea.vmem %s2, %s364
      // Predicated region
      $region29: #{inception_block_forward.3} parent=27 // pred_check
        %p366 = pneg %p83
      $region30: #{inception_block_forward.3} parent=27 // pred_check_branch
        %368 = sbr.rel (%p366) target = $region32
      $region31: #{inception_block_forward.3} parent=27 // pred_region
        %s369 = smul.u32 2, %s13
      $region32: #{inception_block_forward.3} parent=27 // pred_fallthru
        _
    $region28: #{inception_block_forward.3} parent=5 // pred_fallthru
      _
    %p370 = scmp.le.s32.totalorder 2, %s8
    // Predicated region
    $region33: #{inception_block_forward.3} parent=5 // pred_check
      %p371 = pneg %p370
    $region34: #{inception_block_forward.3} parent=5 // pred_check_branch
      %373 = sbr.rel (%p371) target = $region36
    $region35: #{inception_block_forward.3} parent=5 // pred_region
      %s374 = ssub.s32 %s8, 2
      // Predicated region
      $region37: #{inception_block_forward.3} parent=35 // pred_check
        %p375 = pneg %p89
      $region38: #{inception_block_forward.3} parent=35 // pred_check_branch
        %377 = sbr.rel (%p375) target = $region40
      $region39: #{inception_block_forward.3} parent=35 // pred_region
        %s378 = smul.u32 2, %s14
        %p379 = scmp.lt.s32.totalorder %s378, 3
        %s380 = scalar_select %p379, %s378, 3
        %s381 = smul.addr %s380, 2
        %s382 = smul.addr %s381, 8
        %s383 = scalar_lea.vmem %s2, %s382
      $region40: #{inception_block_forward.3} parent=35 // pred_fallthru
        _
    $region36: #{inception_block_forward.3} parent=5 // pred_fallthru
      _
  $region6: #{inception_block_forward.3} parent=0 // loop_footer
    %s12 = sadd.s32 1, %s8
  $region7: #{inception_block_forward.3} parent=0 // loop_footer_branch
    %7 = sbr.rel target = $region3
  $region8: #{inception_block_forward.3} parent=0 // loop_exit
    _

// kernel: inception_block_forward.2
$region0: #{inception_block_forward.2}
  #allocation0 [shape = 'u32[]', space=smem, size = 0x4, offset = 0x4, fixed_abs, tag = 'smem constant byte address 0x4 - core index']
  #allocation1 [shape = 'u32[144,128]{1,0:T(1,128)}', space=vmem, size = 0x12000, scoped, tag = 'internal scratch']
  %s0 = inlined_call_operand.vmem [shape: f32[2,36,256], index: 0, kind: input, shape index: {}]
  %s1 = inlined_call_operand.vmem [shape: f32[2,16,208], index: 1, kind: input, shape index: {}]
  %s2 = inlined_call_operand.vmem [shape: f32[2,16,208], index: 2, kind: input, shape index: {}]
  %s3 = inlined_call_operand.vmem [shape: f32[6,36], index: 3, kind: input, shape index: {}]
  %s4 = inlined_call_operand.vmem [shape: f32[6,1], index: 4, kind: input, shape index: {}]
  %s5 = inlined_call_operand.vmem [shape: f32[2,16], index: 5, kind: input, shape index: {}]
  %s6 = inlined_call_operand.vmem [shape: f32[2,1], index: 6, kind: input, shape index: {}]
  %s7 = inlined_call_operand.vmem [shape: f32[2,16], index: 7, kind: input, shape index: {}]
  %s8 = inlined_call_operand.vmem [shape: f32[2,1], index: 8, kind: input, shape index: {}]
  %s9 = inlined_call_operand.vmem [shape: f32[2,6,256], index: 9, kind: output, shape index: {0}]
  %s10 = inlined_call_operand.vmem [shape: f32[2,2,208], index: 10, kind: output, shape index: {1}]
  %s11 = inlined_call_operand.vmem [shape: f32[2,2,208], index: 11, kind: output, shape index: {2}]
  %12 = xla_tuple %s9, %s10, %s11
  %s13 = sld [smem:[#allocation0]]
  $region85: #{inception_block_forward.2} parent=0
    _
  %s15 = ssub.s32 1, %s13
  %s16 = scalar_select 0, %s15, %s13
  loop: start=0, step=1, limit=4
  $region2: #{inception_block_forward.2} parent=0 // loop_pre_header
    _
  $region3: #{inception_block_forward.2} parent=0 // loop_header
    %s18 = sphi 0, %s22
    %p19 = scmp.ge.s32.totalorder %s18, 4
    %s28 = sphi 0, %s30
    %s31 = sphi 0, %s28
    %s32 = sphi 0, %s31
    %s48 = sphi 0, %s32
    %s54 = sphi 0, %s56
    %s57 = sphi 0, %s54
    %s58 = sphi 0, %s57
    %s74 = sphi 0, %s58
    %s80 = sphi 0, %s82
    %s83 = sphi 0, %s80
    %s84 = sphi 0, %s83
    %s100 = sphi 0, %s84
    %s104 = sphi 0, %s104
    %s106 = sphi 0, %s104
    %s107 = sphi 0, %s106
    %s121 = sphi 0, %s107
    %s125 = sphi 0, %s125
    %s127 = sphi 0, %s125
    %s128 = sphi 0, %s127
    %s142 = sphi 0, %s128
    %s146 = sphi 0, %s146
    %s148 = sphi 0, %s146
    %s149 = sphi 0, %s148
    %s163 = sphi 0, %s149
    %s167 = sphi 0, %s167
    %s169 = sphi 0, %s167
    %s170 = sphi 0, %s169
    %s184 = sphi 0, %s170
    %s188 = sphi 0, %s188
    %s190 = sphi 0, %s188
    %s191 = sphi 0, %s190
    %s205 = sphi 0, %s191
    %s209 = sphi 0, %s209
    %s211 = sphi 0, %s209
    %s212 = sphi 0, %s211
    %s226 = sphi 0, %s212
    %s232 = sphi 0, %s234
    %s235 = sphi 0, %s232
    %s236 = sphi 0, %s235
    %s252 = sphi 0, %s236
    %s258 = sphi 0, %s260
    %s261 = sphi 0, %s258
    %s262 = sphi 0, %s261
    %s278 = sphi 0, %s262
    %s284 = sphi 0, %s286
    %s287 = sphi 0, %s284
    %s288 = sphi 0, %s287
    %s304 = sphi 0, %s288
  $region4: #{inception_block_forward.2} parent=0 // loop_header_branch
    %21 = sbr.rel (%p19) target = $region8
  $region5: #{inception_block_forward.2} parent=0 // loop_body
    %s23 = ssub.s32 %s18, 1
    %s24 = ssub.s32 %s18, 2
    %s25 = sadd.s32 %s18, 1
    %s26 = ssub.s32 %s18, %s25
    %p27 = scmp.eq.s32.totalorder %s26, 0
    %s29 = sadd.s32 %s28, 1
    %s30 = scalar_select %p27, %s28, %s29
    %p33 = pneg %p27
    %p34 = scmp.eq.s32.totalorder %s18, 1
    %p35 = por %p33, %p34
    %p36 = scmp.ne.s32.totalorder %s28, %s31
    %p37 = scmp.eq.s32.totalorder %s18, 0
    %p38 = por %p36, %p37
    %p39 = scmp.ne.s32.totalorder %s28, %s31
    %p40 = scmp.eq.s32.totalorder %s23, 1
    %p41 = por %p39, %p40
    %p42 = scmp.ne.s32.totalorder %s31, %s32
    %p43 = scmp.eq.s32.totalorder %s23, 0
    %p44 = por %p42, %p43
    %p45 = scmp.ne.s32.totalorder %s31, %s32
    %p46 = scmp.eq.s32.totalorder %s24, 1
    %p47 = por %p45, %p46
    %p49 = scmp.ne.s32.totalorder %s32, %s48
    %p50 = scmp.eq.s32.totalorder %s24, 0
    %p51 = por %p49, %p50
    %s52 = ssub.s32 %s18, %s25
    %p53 = scmp.eq.s32.totalorder %s52, 0
    %s55 = sadd.s32 %s54, 1
    %s56 = scalar_select %p53, %s54, %s55
    %p59 = pneg %p53
    %p60 = scmp.eq.s32.totalorder %s18, 1
    %p61 = por %p59, %p60
    %p62 = scmp.ne.s32.totalorder %s54, %s57
    %p63 = scmp.eq.s32.totalorder %s18, 0
    %p64 = por %p62, %p63
    %p65 = scmp.ne.s32.totalorder %s54, %s57
    %p66 = scmp.eq.s32.totalorder %s23, 1
    %p67 = por %p65, %p66
    %p68 = scmp.ne.s32.totalorder %s57, %s58
    %p69 = scmp.eq.s32.totalorder %s23, 0
    %p70 = por %p68, %p69
    %p71 = scmp.ne.s32.totalorder %s57, %s58
    %p72 = scmp.eq.s32.totalorder %s24, 1
    %p73 = por %p71, %p72
    %p75 = scmp.ne.s32.totalorder %s58, %s74
    %p76 = scmp.eq.s32.totalorder %s24, 0
    %p77 = por %p75, %p76
    %s78 = ssub.s32 %s18, %s25
    %p79 = scmp.eq.s32.totalorder %s78, 0
    %s81 = sadd.s32 %s80, 1
    %s82 = scalar_select %p79, %s80, %s81
    %p85 = pneg %p79
    %p86 = scmp.eq.s32.totalorder %s18, 1
    %p87 = por %p85, %p86
    %p88 = scmp.ne.s32.totalorder %s80, %s83
    %p89 = scmp.eq.s32.totalorder %s18, 0
    %p90 = por %p88, %p89
    %p91 = scmp.ne.s32.totalorder %s80, %s83
    %p92 = scmp.eq.s32.totalorder %s23, 1
    %p93 = por %p91, %p92
    %p94 = scmp.ne.s32.totalorder %s83, %s84
    %p95 = scmp.eq.s32.totalorder %s23, 0
    %p96 = por %p94, %p95
    %p97 = scmp.ne.s32.totalorder %s83, %s84
    %p98 = scmp.eq.s32.totalorder %s24, 1
    %p99 = por %p97, %p98
    %p101 = scmp.ne.s32.totalorder %s84, %s100
    %p102 = scmp.eq.s32.totalorder %s24, 0
    %p103 = por %p101, %p102
    %s105 = sadd.s32 %s104, 1
    %p108 = scmp.eq.s32.totalorder %s18, 1
    %p109 = scmp.ne.s32.totalorder %s104, %s106
    %p110 = scmp.eq.s32.totalorder %s18, 0
    %p111 = por %p109, %p110
    %p112 = scmp.ne.s32.totalorder %s104, %s106
    %p113 = scmp.eq.s32.totalorder %s23, 1
    %p114 = por %p112, %p113
    %p115 = scmp.ne.s32.totalorder %s106, %s107
    %p116 = scmp.eq.s32.totalorder %s23, 0
    %p117 = por %p115, %p116
    %p118 = scmp.ne.s32.totalorder %s106, %s107
    %p119 = scmp.eq.s32.totalorder %s24, 1
    %p120 = por %p118, %p119
    %p122 = scmp.ne.s32.totalorder %s107, %s121
    %p123 = scmp.eq.s32.totalorder %s24, 0
    %p124 = por %p122, %p123
    %s126 = sadd.s32 %s125, 1
    %p129 = scmp.eq.s32.totalorder %s18, 1
    %p130 = scmp.ne.s32.totalorder %s125, %s127
    %p131 = scmp.eq.s32.totalorder %s18, 0
    %p132 = por %p130, %p131
    %p133 = scmp.ne.s32.totalorder %s125, %s127
    %p134 = scmp.eq.s32.totalorder %s23, 1
    %p135 = por %p133, %p134
    %p136 = scmp.ne.s32.totalorder %s127, %s128
    %p137 = scmp.eq.s32.totalorder %s23, 0
    %p138 = por %p136, %p137
    %p139 = scmp.ne.s32.totalorder %s127, %s128
    %p140 = scmp.eq.s32.totalorder %s24, 1
    %p141 = por %p139, %p140
    %p143 = scmp.ne.s32.totalorder %s128, %s142
    %p144 = scmp.eq.s32.totalorder %s24, 0
    %p145 = por %p143, %p144
    %s147 = sadd.s32 %s146, 1
    %p150 = scmp.eq.s32.totalorder %s18, 1
    %p151 = scmp.ne.s32.totalorder %s146, %s148
    %p152 = scmp.eq.s32.totalorder %s18, 0
    %p153 = por %p151, %p152
    %p154 = scmp.ne.s32.totalorder %s146, %s148
    %p155 = scmp.eq.s32.totalorder %s23, 1
    %p156 = por %p154, %p155
    %p157 = scmp.ne.s32.totalorder %s148, %s149
    %p158 = scmp.eq.s32.totalorder %s23, 0
    %p159 = por %p157, %p158
    %p160 = scmp.ne.s32.totalorder %s148, %s149
    %p161 = scmp.eq.s32.totalorder %s24, 1
    %p162 = por %p160, %p161
    %p164 = scmp.ne.s32.totalorder %s149, %s163
    %p165 = scmp.eq.s32.totalorder %s24, 0
    %p166 = por %p164, %p165
    %s168 = sadd.s32 %s167, 1
    %p171 = scmp.eq.s32.totalorder %s18, 1
    %p172 = scmp.ne.s32.totalorder %s167, %s169
    %p173 = scmp.eq.s32.totalorder %s18, 0
    %p174 = por %p172, %p173
    %p175 = scmp.ne.s32.totalorder %s167, %s169
    %p176 = scmp.eq.s32.totalorder %s23, 1
    %p177 = por %p175, %p176
    %p178 = scmp.ne.s32.totalorder %s169, %s170
    %p179 = scmp.eq.s32.totalorder %s23, 0
    %p180 = por %p178, %p179
    %p181 = scmp.ne.s32.totalorder %s169, %s170
    %p182 = scmp.eq.s32.totalorder %s24, 1
    %p183 = por %p181, %p182
    %p185 = scmp.ne.s32.totalorder %s170, %s184
    %p186 = scmp.eq.s32.totalorder %s24, 0
    %p187 = por %p185, %p186
    %s189 = sadd.s32 %s188, 1
    %p192 = scmp.eq.s32.totalorder %s18, 1
    %p193 = scmp.ne.s32.totalorder %s188, %s190
    %p194 = scmp.eq.s32.totalorder %s18, 0
    %p195 = por %p193, %p194
    %p196 = scmp.ne.s32.totalorder %s188, %s190
    %p197 = scmp.eq.s32.totalorder %s23, 1
    %p198 = por %p196, %p197
    %p199 = scmp.ne.s32.totalorder %s190, %s191
    %p200 = scmp.eq.s32.totalorder %s23, 0
    %p201 = por %p199, %p200
    %p202 = scmp.ne.s32.totalorder %s190, %s191
    %p203 = scmp.eq.s32.totalorder %s24, 1
    %p204 = por %p202, %p203
    %p206 = scmp.ne.s32.totalorder %s191, %s205
    %p207 = scmp.eq.s32.totalorder %s24, 0
    %p208 = por %p206, %p207
    %s210 = sadd.s32 %s209, 1
    %p213 = scmp.eq.s32.totalorder %s18, 1
    %p214 = scmp.ne.s32.totalorder %s209, %s211
    %p215 = scmp.eq.s32.totalorder %s18, 0
    %p216 = por %p214, %p215
    %p217 = scmp.ne.s32.totalorder %s209, %s211
    %p218 = scmp.eq.s32.totalorder %s23, 1
    %p219 = por %p217, %p218
    %p220 = scmp.ne.s32.totalorder %s211, %s212
    %p221 = scmp.eq.s32.totalorder %s23, 0
    %p222 = por %p220, %p221
    %p223 = scmp.ne.s32.totalorder %s211, %s212
    %p224 = scmp.eq.s32.totalorder %s24, 1
    %p225 = por %p223, %p224
    %p227 = scmp.ne.s32.totalorder %s212, %s226
    %p228 = scmp.eq.s32.totalorder %s24, 0
    %p229 = por %p227, %p228
    %s230 = ssub.s32 %s18, %s25
    %p231 = scmp.eq.s32.totalorder %s230, 0
    %s233 = sadd.s32 %s232, 1
    %s234 = scalar_select %p231, %s232, %s233
    %p237 = pneg %p231
    %p238 = scmp.eq.s32.totalorder %s18, 1
    %p239 = por %p237, %p238
    %p240 = scmp.ne.s32.totalorder %s232, %s235
    %p241 = scmp.eq.s32.totalorder %s18, 0
    %p242 = por %p240, %p241
    %p243 = scmp.ne.s32.totalorder %s232, %s235
    %p244 = scmp.eq.s32.totalorder %s23, 1
    %p245 = por %p243, %p244
    %p246 = scmp.ne.s32.totalorder %s235, %s236
    %p247 = scmp.eq.s32.totalorder %s23, 0
    %p248 = por %p246, %p247
    %p249 = scmp.ne.s32.totalorder %s235, %s236
    %p250 = scmp.eq.s32.totalorder %s24, 1
    %p251 = por %p249, %p250
    %p253 = scmp.ne.s32.totalorder %s236, %s252
    %p254 = scmp.eq.s32.totalorder %s24, 0
    %p255 = por %p253, %p254
    %s256 = ssub.s32 %s18, %s25
    %p257 = scmp.eq.s32.totalorder %s256, 0
    %s259 = sadd.s32 %s258, 1
    %s260 = scalar_select %p257, %s258, %s259
    %p263 = pneg %p257
    %p264 = scmp.eq.s32.totalorder %s18, 1
    %p265 = por %p263, %p264
    %p266 = scmp.ne.s32.totalorder %s258, %s261
    %p267 = scmp.eq.s32.totalorder %s18, 0
    %p268 = por %p266, %p267
    %p269 = scmp.ne.s32.totalorder %s258, %s261
    %p270 = scmp.eq.s32.totalorder %s23, 1
    %p271 = por %p269, %p270
    %p272 = scmp.ne.s32.totalorder %s261, %s262
    %p273 = scmp.eq.s32.totalorder %s23, 0
    %p274 = por %p272, %p273
    %p275 = scmp.ne.s32.totalorder %s261, %s262
    %p276 = scmp.eq.s32.totalorder %s24, 1
    %p277 = por %p275, %p276
    %p279 = scmp.ne.s32.totalorder %s262, %s278
    %p280 = scmp.eq.s32.totalorder %s24, 0
    %p281 = por %p279, %p280
    %s282 = ssub.s32 %s18, %s25
    %p283 = scmp.eq.s32.totalorder %s282, 0
    %s285 = sadd.s32 %s284, 1
    %s286 = scalar_select %p283, %s284, %s285
    %p289 = pneg %p283
    %p290 = scmp.eq.s32.totalorder %s18, 1
    %p291 = por %p289, %p290
    %p292 = scmp.ne.s32.totalorder %s284, %s287
    %p293 = scmp.eq.s32.totalorder %s18, 0
    %p294 = por %p292, %p293
    %p295 = scmp.ne.s32.totalorder %s284, %s287
    %p296 = scmp.eq.s32.totalorder %s23, 1
    %p297 = por %p295, %p296
    %p298 = scmp.ne.s32.totalorder %s287, %s288
    %p299 = scmp.eq.s32.totalorder %s23, 0
    %p300 = por %p298, %p299
    %p301 = scmp.ne.s32.totalorder %s287, %s288
    %p302 = scmp.eq.s32.totalorder %s24, 1
    %p303 = por %p301, %p302
    %p305 = scmp.ne.s32.totalorder %s288, %s304
    %p306 = scmp.eq.s32.totalorder %s24, 0
    %p307 = por %p305, %p306
    %p308 = scmp.le.s32.totalorder 1, %s18
    %p309 = scmp.lt.s32.totalorder %s18, 3
    %p310 = pnand %p308, %p309
    %p311 = pneg %p310
    // Predicated region
    $region9: #{inception_block_forward.2} parent=5 // pred_check
      _
    $region10: #{inception_block_forward.2} parent=5 // pred_check_branch
      %313 = sbr.rel (%p310) target = $region12
    $region11: #{inception_block_forward.2} parent=5 // pred_region
      %s314 = ssub.s32 %s18, 1
      // Predicated region
      $region13: #{inception_block_forward.2} parent=11 // pred_check
        %p315 = pneg %p117
      $region14: #{inception_block_forward.2} parent=11 // pred_check_branch
        %317 = sbr.rel (%p315) target = $region16
      $region15: #{inception_block_forward.2} parent=11 // pred_region
        _
      $region16: #{inception_block_forward.2} parent=11 // pred_fallthru
        _
      // Predicated region
      $region17: #{inception_block_forward.2} parent=11 // pred_check
        %p318 = pneg %p138
      $region18: #{inception_block_forward.2} parent=11 // pred_check_branch
        %320 = sbr.rel (%p318) target = $region20
      $region19: #{inception_block_forward.2} parent=11 // pred_region
        _
      $region20: #{inception_block_forward.2} parent=11 // pred_fallthru
        _
      // Predicated region
      $region21: #{inception_block_forward.2} parent=11 // pred_check
        %p321 = pneg %p159
      $region22: #{inception_block_forward.2} parent=11 // pred_check_branch
        %323 = sbr.rel (%p321) target = $region24
      $region23: #{inception_block_forward.2} parent=11 // pred_region
        _
      $region24: #{inception_block_forward.2} parent=11 // pred_fallthru
        _
      // Predicated region
      $region25: #{inception_block_forward.2} parent=11 // pred_check
        %p324 = pneg %p180
      $region26: #{inception_block_forward.2} parent=11 // pred_check_branch
        %326 = sbr.rel (%p324) target = $region28
      $region27: #{inception_block_forward.2} parent=11 // pred_region
        _
      $region28: #{inception_block_forward.2} parent=11 // pred_fallthru
        _
      // Predicated region
      $region29: #{inception_block_forward.2} parent=11 // pred_check
        %p327 = pneg %p201
      $region30: #{inception_block_forward.2} parent=11 // pred_check_branch
        %329 = sbr.rel (%p327) target = $region32
      $region31: #{inception_block_forward.2} parent=11 // pred_region
        _
      $region32: #{inception_block_forward.2} parent=11 // pred_fallthru
        _
      // Predicated region
      $region33: #{inception_block_forward.2} parent=11 // pred_check
        %p330 = pneg %p222
      $region34: #{inception_block_forward.2} parent=11 // pred_check_branch
        %332 = sbr.rel (%p330) target = $region36
      $region35: #{inception_block_forward.2} parent=11 // pred_region
        _
      $region36: #{inception_block_forward.2} parent=11 // pred_fallthru
        _
    $region12: #{inception_block_forward.2} parent=5 // pred_fallthru
      _
    %p333 = scmp.lt.s32.totalorder %s18, 2
    // Predicated region
    $region37: #{inception_block_forward.2} parent=5 // pred_check
      %p334 = pneg %p333
    $region38: #{inception_block_forward.2} parent=5 // pred_check_branch
      %336 = sbr.rel (%p334) target = $region40
    $region39: #{inception_block_forward.2} parent=5 // pred_region
      // Predicated region
      $region41: #{inception_block_forward.2} parent=39 // pred_check
        %p337 = pneg %p38
      $region42: #{inception_block_forward.2} parent=39 // pred_check_branch
        %339 = sbr.rel (%p337) target = $region44
      $region43: #{inception_block_forward.2} parent=39 // pred_region
        %p340 = scmp.lt.s32.totalorder %s18, 1
        %s341 = scalar_select %p340, %s18, 1
        %s342 = smul.addr %s341, 10
        %s343 = smul.addr %s342, 8
        %s344 = scalar_lea.vmem %s0, %s343
      $region44: #{inception_block_forward.2} parent=39 // pred_fallthru
        _
      // Predicated region
      $region45: #{inception_block_forward.2} parent=39 // pred_check
        %p345 = pneg %p64
      $region46: #{inception_block_forward.2} parent=39 // pred_check_branch
        %347 = sbr.rel (%p345) target = $region48
      $region47: #{inception_block_forward.2} parent=39 // pred_region
        %p348 = scmp.lt.s32.totalorder %s18, 1
        %s349 = scalar_select %p348, %s18, 1
        %s350 = smul.addr %s349, 4
        %s351 = smul.addr %s350, 8
        %s352 = scalar_lea.vmem %s1, %s351
      $region48: #{inception_block_forward.2} parent=39 // pred_fallthru
        _
      // Predicated region
      $region49: #{inception_block_forward.2} parent=39 // pred_check
        %p353 = pneg %p90
      $region50: #{inception_block_forward.2} parent=39 // pred_check_branch
        %355 = sbr.rel (%p353) target = $region52
      $region51: #{inception_block_forward.2} parent=39 // pred_region
        %p356 = scmp.lt.s32.totalorder %s18, 1
        %s357 = scalar_select %p356, %s18, 1
        %s358 = smul.addr %s357, 4
        %s359 = smul.addr %s358, 8
        %s360 = scalar_lea.vmem %s2, %s359
      $region52: #{inception_block_forward.2} parent=39 // pred_fallthru
        _
    $region40: #{inception_block_forward.2} parent=5 // pred_fallthru
      _
    %p361 = scmp.le.s32.totalorder 1, %s18
    %p362 = scmp.lt.s32.totalorder %s18, 3
    %p363 = pnand %p361, %p362
    %p364 = pneg %p363
    // Predicated region
    $region53: #{inception_block_forward.2} parent=5 // pred_check
      _
    $region54: #{inception_block_forward.2} parent=5 // pred_check_branch
      %366 = sbr.rel (%p363) target = $region56
    $region55: #{inception_block_forward.2} parent=5 // pred_region
      %s367 = ssub.s32 %s18, 1
      %p368 = scmp.lt.s32.totalorder %s23, 1
      %s369 = scalar_select %p368, %s23, 1
      %s370 = smul.addr %s369, 10
      %s371 = smul.addr %s370, 8
      %s372 = scalar_lea.vmem %s0, %s371
      %p373 = pneg %p44
      %p374 = pneg %p41
      %p375 = scmp.lt.s32.totalorder %s23, 1
      %s376 = scalar_select %p375, %s23, 1
      %s377 = smul.addr %s376, 4
      %s378 = smul.addr %s377, 8
      %s379 = scalar_lea.vmem %s1, %s378
      %p380 = pneg %p70
      %p381 = pneg %p67
      %p382 = scmp.lt.s32.totalorder %s23, 1
      %s383 = scalar_select %p382, %s23, 1
      %s384 = smul.addr %s383, 4
      %s385 = smul.addr %s384, 8
      %s386 = scalar_lea.vmem %s2, %s385
      %p387 = pneg %p96
      %p388 = pneg %p93
      %p389 = pneg %p117
      %p390 = pneg %p114
      %p391 = pneg %p138
      %p392 = pneg %p135
      %p393 = pneg %p159
      %p394 = pneg %p156
      %p395 = pneg %p180
      %p396 = pneg %p177
      %p397 = pneg %p201
      %p398 = pneg %p198
      %p399 = pneg %p222
      %p400 = pneg %p219
      %p401 = pneg %p248
      %p402 = pneg %p245
      %p403 = scmp.lt.s32.totalorder %s23, 1
      %s404 = scalar_select %p403, %s23, 1
      %s405 = smul.addr %s404, 2
      %s406 = smul.addr %s405, 8
      %s407 = scalar_lea.vmem %s9, %s406
      %p408 = pneg %p274
      %p409 = pneg %p271
      %p410 = scmp.lt.s32.totalorder %s23, 1
      %s411 = scalar_select %p410, %s23, 1
      %s412 = smul.addr %s411, 2
      %s413 = smul.addr %s412, 2
      %s414 = scalar_lea.vmem %s10, %s413
      %p415 = pneg %p300
      %p416 = pneg %p297
      %p417 = scmp.lt.s32.totalorder %s23, 1
      %s418 = scalar_select %p417, %s23, 1
      %s419 = smul.addr %s418, 2
      %s420 = smul.addr %s419, 2
      %s421 = scalar_lea.vmem %s11, %s420
      %p422 = scmp.lt.s32.totalorder %s23, 1
      %s423 = scalar_select %p422, %s23, 1
      %s424 = smul.addr %s423, 10
      %s425 = smul.addr %s424, 8
      %s426 = scalar_lea.vmem %s0, %s425
      %p427 = scmp.lt.s32.totalorder %s23, 1
      %s428 = scalar_select %p427, %s23, 1
      %s429 = smul.addr %s428, 4
      %s430 = smul.addr %s429, 8
      %s431 = scalar_lea.vmem %s1, %s430
      %p432 = scmp.lt.s32.totalorder %s23, 1
      %s433 = scalar_select %p432, %s23, 1
      %s434 = smul.addr %s433, 4
      %s435 = smul.addr %s434, 8
      %s436 = scalar_lea.vmem %s2, %s435
      %p437 = scmp.lt.s32.totalorder %s23, 1
      %s438 = scalar_select %p437, %s23, 1
      %s439 = smul.addr %s438, 2
      %s440 = smul.addr %s439, 8
      %s441 = scalar_lea.vmem %s9, %s440
      %p442 = scmp.lt.s32.totalorder %s23, 1
      %s443 = scalar_select %p442, %s23, 1
      %s444 = smul.addr %s443, 2
      %s445 = smul.addr %s444, 2
      %s446 = scalar_lea.vmem %s10, %s445
      %p447 = scmp.lt.s32.totalorder %s23, 1
      %s448 = scalar_select %p447, %s23, 1
      %s449 = smul.addr %s448, 2
      %s450 = smul.addr %s449, 2
      %s451 = scalar_lea.vmem %s11, %s450
      %v452 = vld [vmem:[%s3] sm:$0x3f]
      %v453 = vld [vmem:[%s426] sm:$0xff]
      %v454 = vld [vmem:[%s426 + $0x8] sm:$0xff]
      %v455 = vld [vmem:[%s426 + $0x10] sm:$0xff]
      %v456 = vld [vmem:[%s426 + $0x18] sm:$0xff]
      %v457 = vld [vmem:[%s426 + $0x20] sm:$0xff]
      %v458 = vld [vmem:[%s426 + $0x28] sm:$0xff]
      %v459 = vld [vmem:[%s426 + $0x30] sm:$0xff]
      %v460 = vld [vmem:[%s426 + $0x38] sm:$0xff]
      %v461 = vld [vmem:[%s426 + $0x40] sm:$0xf]
      %v462 = vld [vmem:[%s426 + $0x48] sm:$0xf]
      %v463 = vld [vmem:[%s4] sm:$0x3f]
      %465 = vset.pattern.permute.xlu0 0
      %466 = vperm.xlu0 %465, %v463
      %v467 = vpop.permute.xlu0 %466
      %vm469 = vcmask 293888
      %v471 = vsel %vm469, %v452, 0
      %vm473 = vcmask 1043456
      %v475 = vsel %vm473, %v461, 0
      %v478 = vsel %vm473, %v462, 0
      %480 = vmatprep.subr.mxu0 0.0
      %481 = vmatpush1.msra.mxu0 0.0
      %482 = vmatprep.subr.mxu0 0.0
      %483 = vmatpush1.msra.mxu0 0.0
      %484 = vmatprep.subr.mxu0 0.0
      %485 = vmatpush1.msra.mxu0 0.0
      %486 = vmatprep.subr.mxu0 0.0
      %487 = vmatpush1.msra.mxu0 0.0
      %488 = vmatprep.subr.mxu0 0.0
      %489 = vmatpush1.msra.mxu0 0.0
      %490 = vmatprep.subr.mxu0 0.0
      %491 = vmatpush1.msra.mxu0 0.0
      %492 = vmatprep.subr.mxu0 0.0
      %493 = vmatpush1.msra.mxu0 0.0
      %494 = vmatprep.subr.mxu0 0.0
      %495 = vmatpush1.msra.mxu0 0.0
      %496 = vmatprep.subr.mxu0 0.0
      %497 = vmatpush1.msra.mxu0 0.0
      %498 = vmatprep.subr.mxu0 0.0
      %499 = vmatpush1.msra.mxu0 0.0
      %500 = vmatprep.subr.mxu0 0.0
      %501 = vmatpush1.msra.mxu0 0.0
      %502 = vmatprep.subr.mxu0 %v478
      %503 = vmatpush1.msra.mxu0 %v475
      %504 = vmatprep.subr.mxu0 %v460
      %505 = vmatpush1.msra.mxu0 %v459
      %506 = vmatprep.subr.mxu0 %v458
      %507 = vmatpush1.msra.mxu0 %v457
      %508 = vmatprep.subr.mxu0 %v456
      %509 = vmatpush1.msra.mxu0 %v455
      %510 = vmatprep.subr.mxu0 %v454
      %511 = vmatpush1.msra.mxu0 %v453
      %512 = vmatprep.subr.mxu0 0.0
      %513 = vmatpush2.msra.mxu0 0.0
      %514 = vmatprep.subr.mxu0 0.0
      %515 = vmatpush2.msra.mxu0 0.0
      %516 = vmatprep.subr.mxu0 0.0
      %517 = vmatpush2.msra.mxu0 0.0
      %518 = vmatprep.subr.mxu0 0.0
      %519 = vmatpush2.msra.mxu0 0.0
      %520 = vmatprep.subr.mxu0 0.0
      %521 = vmatpush2.msra.mxu0 0.0
      %522 = vmatprep.subr.mxu0 0.0
      %523 = vmatpush2.msra.mxu0 0.0
      %524 = vmatprep.subr.mxu0 0.0
      %525 = vmatpush2.msra.mxu0 0.0
      %526 = vmatprep.subr.mxu0 0.0
      %527 = vmatpush2.msra.mxu0 0.0
      %528 = vmatprep.subr.mxu0 0.0
      %529 = vmatpush2.msra.mxu0 0.0
      %530 = vmatprep.subr.mxu0 0.0
      %531 = vmatpush2.msra.mxu0 0.0
      %532 = vmatprep.subr.mxu0 0.0
      %533 = vmatpush2.msra.mxu0 0.0
      %534 = vmatprep.subr.mxu0 0.0
      %535 = vmatpush2.msra.mxu0 0.0
      %536 = vmatprep.subr.mxu0 0.0
      %537 = vmatpush2.msra.mxu0 0.0
      %538 = vmatprep.subr.mxu0 0.0
      %539 = vmatpush2.msra.mxu0 0.0
      %540 = vmatprep.subr.mxu0 0.0
      %541 = vmatpush2.msra.mxu0 0.0
      %542 = vmatprep.subr.mxu0 0.0
      %543 = vmatpush2.msra.mxu0 0.0
      %544 = vmatprep.mubr.f32.mxu0 0.0
      %545 = vmatmul.mubr.f32.gmra.mxu0 %v471
      %v546 = vpop.f32.mrf.mxu0
      %v547 = vadd.f32 %v467, %v546
      %v548 = vpop.f32.mrf.mxu0
      %v549 = vadd.f32 %v467, %v548
      %550 = vdwg.mxu0
      %v551 = vmax.f32 %v547, 0.0
      %v552 = vmax.f32 %v549, 0.0
      %553 = vst [vmem:[%s441] sm:$0x3f] %v551
      %554 = vst [vmem:[%s441 + $0x8] sm:$0x3f] %v552
      %v555 = vld [vmem:[%s5] sm:$0x3]
      %v556 = vld [vmem:[%s431] sm:$0xff]
      %v557 = vld [vmem:[%s431 + $0x8] sm:$0xff]
      %v558 = vld [vmem:[%s431 + $0x10] sm:$0xff]
      %v559 = vld [vmem:[%s431 + $0x18] sm:$0xff]
      %v560 = vld [vmem:[%s6] sm:$0x3]
      %562 = vset.pattern.permute.xlu0 0
      %563 = vperm.xlu0 %562, %v560
      %v564 = vpop.permute.xlu0 %563
      %vm566 = vcmask 130048
      %v568 = vsel %vm566, %v555, 0
      %570 = vmatprep.subr.mxu0 0.0
      %571 = vmatpush1.msra.mxu0 0.0
      %572 = vmatprep.subr.mxu0 0.0
      %573 = vmatpush1.msra.mxu0 0.0
      %574 = vmatprep.subr.mxu0 0.0
      %575 = vmatpush1.msra.mxu0 0.0
      %576 = vmatprep.subr.mxu0 0.0
      %577 = vmatpush1.msra.mxu0 0.0
      %578 = vmatprep.subr.mxu0 0.0
      %579 = vmatpush1.msra.mxu0 0.0
      %580 = vmatprep.subr.mxu0 0.0
      %581 = vmatpush1.msra.mxu0 0.0
      %582 = vmatprep.subr.mxu0 0.0
      %583 = vmatpush1.msra.mxu0 0.0
      %584 = vmatprep.subr.mxu0 0.0
      %585 = vmatpush1.msra.mxu0 0.0
      %586 = vmatprep.subr.mxu0 0.0
      %587 = vmatpush1.msra.mxu0 0.0
      %588 = vmatprep.subr.mxu0 0.0
      %589 = vmatpush1.msra.mxu0 0.0
      %590 = vmatprep.subr.mxu0 0.0
      %591 = vmatpush1.msra.mxu0 0.0
      %592 = vmatprep.subr.mxu0 0.0
      %593 = vmatpush1.msra.mxu0 0.0
      %594 = vmatprep.subr.mxu0 0.0
      %595 = vmatpush1.msra.mxu0 0.0
      %596 = vmatprep.subr.mxu0 0.0
      %597 = vmatpush1.msra.mxu0 0.0
      %598 = vmatprep.subr.mxu0 %v559
      %599 = vmatpush1.msra.mxu0 %v558
      %600 = vmatprep.subr.mxu0 %v557
      %601 = vmatpush1.msra.mxu0 %v556
      %602 = vmatprep.subr.mxu0 0.0
      %603 = vmatpush2.msra.mxu0 0.0
      %604 = vmatprep.subr.mxu0 0.0
      %605 = vmatpush2.msra.mxu0 0.0
      %606 = vmatprep.subr.mxu0 0.0
      %607 = vmatpush2.msra.mxu0 0.0
      %608 = vmatprep.subr.mxu0 0.0
      %609 = vmatpush2.msra.mxu0 0.0
      %610 = vmatprep.subr.mxu0 0.0
      %611 = vmatpush2.msra.mxu0 0.0
      %612 = vmatprep.subr.mxu0 0.0
      %613 = vmatpush2.msra.mxu0 0.0
      %614 = vmatprep.subr.mxu0 0.0
      %615 = vmatpush2.msra.mxu0 0.0
      %616 = vmatprep.subr.mxu0 0.0
      %617 = vmatpush2.msra.mxu0 0.0
      %618 = vmatprep.subr.mxu0 0.0
      %619 = vmatpush2.msra.mxu0 0.0
      %620 = vmatprep.subr.mxu0 0.0
      %621 = vmatpush2.msra.mxu0 0.0
      %622 = vmatprep.subr.mxu0 0.0
      %623 = vmatpush2.msra.mxu0 0.0
      %624 = vmatprep.subr.mxu0 0.0
      %625 = vmatpush2.msra.mxu0 0.0
      %626 = vmatprep.subr.mxu0 0.0
      %627 = vmatpush2.msra.mxu0 0.0
      %628 = vmatprep.subr.mxu0 0.0
      %629 = vmatpush2.msra.mxu0 0.0
      %630 = vmatprep.subr.mxu0 0.0
      %631 = vmatpush2.msra.mxu0 0.0
      %632 = vmatprep.subr.mxu0 0.0
      %633 = vmatpush2.msra.mxu0 0.0
      %634 = vmatprep.mubr.f32.mxu0 0.0
      %635 = vmatmul.mubr.f32.gmra.mxu0 %v568
      %v636 = vpop.f32.mrf.mxu0
      %v637 = vadd.f32 %v564, %v636
      %v638 = vpop.f32.mrf.mxu0
      %v639 = vadd.f32 %v564, %v638
      %640 = vdwg.mxu0
      %v641 = vmax.f32 %v637, 0.0
      %v642 = vmax.f32 %v639, 0.0
      %v645 = vcombine.low %v641, %v642
      %v647 = vunpack.c.l.s4 1983009808
      %v648 = vunpack.c.0.s8 %v647
      %v649 = vlaneseq
      %v650 = vshrl.u32 %v649, 7
      %v651 = vsub.s32 %v648, %v650
      %v652 = vrot.slane %v645, %v651
      %vm654 = vcmask 1041408
      %vm655 = vcmask 650242
      %vm656 = vmor %vm655, %vm654
      %657 = vst.msk [vmem:[%s446] sm:$0xf] %vm656, %v652
      %v658 = vld [vmem:[%s7] sm:$0x3]
      %v659 = vld [vmem:[%s436] sm:$0xff]
      %v660 = vld [vmem:[%s436 + $0x8] sm:$0xff]
      %v661 = vld [vmem:[%s436 + $0x10] sm:$0xff]
      %v662 = vld [vmem:[%s436 + $0x18] sm:$0xff]
      %v663 = vld [vmem:[%s8] sm:$0x3]
      %665 = vset.pattern.permute.xlu0 0
      %666 = vperm.xlu0 %665, %v663
      %v667 = vpop.permute.xlu0 %666
      %v670 = vsel %vm566, %v658, 0
      %672 = vmatprep.subr.mxu0 0.0
      %673 = vmatpush1.msra.mxu0 0.0
      %674 = vmatprep.subr.mxu0 0.0
      %675 = vmatpush1.msra.mxu0 0.0
      %676 = vmatprep.subr.mxu0 0.0
      %677 = vmatpush1.msra.mxu0 0.0
      %678 = vmatprep.subr.mxu0 0.0
      %679 = vmatpush1.msra.mxu0 0.0
      %680 = vmatprep.subr.mxu0 0.0
      %681 = vmatpush1.msra.mxu0 0.0
      %682 = vmatprep.subr.mxu0 0.0
      %683 = vmatpush1.msra.mxu0 0.0
      %684 = vmatprep.subr.mxu0 0.0
      %685 = vmatpush1.msra.mxu0 0.0
      %686 = vmatprep.subr.mxu0 0.0
      %687 = vmatpush1.msra.mxu0 0.0
      %688 = vmatprep.subr.mxu0 0.0
      %689 = vmatpush1.msra.mxu0 0.0
      %690 = vmatprep.subr.mxu0 0.0
      %691 = vmatpush1.msra.mxu0 0.0
      %692 = vmatprep.subr.mxu0 0.0
      %693 = vmatpush1.msra.mxu0 0.0
      %694 = vmatprep.subr.mxu0 0.0
      %695 = vmatpush1.msra.mxu0 0.0
      %696 = vmatprep.subr.mxu0 0.0
      %697 = vmatpush1.msra.mxu0 0.0
      %698 = vmatprep.subr.mxu0 0.0
      %699 = vmatpush1.msra.mxu0 0.0
      %700 = vmatprep.subr.mxu0 %v662
      %701 = vmatpush1.msra.mxu0 %v661
      %702 = vmatprep.subr.mxu0 %v660
      %703 = vmatpush1.msra.mxu0 %v659
      %704 = vmatprep.subr.mxu0 0.0
      %705 = vmatpush2.msra.mxu0 0.0
      %706 = vmatprep.subr.mxu0 0.0
      %707 = vmatpush2.msra.mxu0 0.0
      %708 = vmatprep.subr.mxu0 0.0
      %709 = vmatpush2.msra.mxu0 0.0
      %710 = vmatprep.subr.mxu0 0.0
      %711 = vmatpush2.msra.mxu0 0.0
      %712 = vmatprep.subr.mxu0 0.0
      %713 = vmatpush2.msra.mxu0 0.0
      %714 = vmatprep.subr.mxu0 0.0
      %715 = vmatpush2.msra.mxu0 0.0
      %716 = vmatprep.subr.mxu0 0.0
      %717 = vmatpush2.msra.mxu0 0.0
      %718 = vmatprep.subr.mxu0 0.0
      %719 = vmatpush2.msra.mxu0 0.0
      %720 = vmatprep.subr.mxu0 0.0
      %721 = vmatpush2.msra.mxu0 0.0
      %722 = vmatprep.subr.mxu0 0.0
      %723 = vmatpush2.msra.mxu0 0.0
      %724 = vmatprep.subr.mxu0 0.0
      %725 = vmatpush2.msra.mxu0 0.0
      %726 = vmatprep.subr.mxu0 0.0
      %727 = vmatpush2.msra.mxu0 0.0
      %728 = vmatprep.subr.mxu0 0.0
      %729 = vmatpush2.msra.mxu0 0.0
      %730 = vmatprep.subr.mxu0 0.0
      %731 = vmatpush2.msra.mxu0 0.0
      %732 = vmatprep.subr.mxu0 0.0
      %733 = vmatpush2.msra.mxu0 0.0
      %734 = vmatprep.subr.mxu0 0.0
      %735 = vmatpush2.msra.mxu0 0.0
      %736 = vmatprep.mubr.f32.mxu0 0.0
      %737 = vmatmul.mubr.f32.gmra.mxu0 %v670
      %v738 = vpop.f32.mrf.mxu0
      %v739 = vadd.f32 %v667, %v738
      %v740 = vpop.f32.mrf.mxu0
      %v741 = vadd.f32 %v667, %v740
      %742 = vdwg.mxu0
      %v743 = vmax.f32 %v739, 0.0
      %v744 = vmax.f32 %v741, 0.0
      %v747 = vcombine.low %v743, %v744
      %v749 = vunpack.c.l.s4 1983009808
      %v750 = vunpack.c.0.s8 %v749
      %v751 = vlaneseq
      %v752 = vshrl.u32 %v751, 7
      %v753 = vsub.s32 %v750, %v752
      %v754 = vrot.slane %v747, %v753
      %756 = vst.msk [vmem:[%s451] sm:$0xf] %vm656, %v754
      %p757 = scmp.lt.s32.totalorder %s23, 1
      %s758 = scalar_select %p757, %s23, 1
      %s759 = smul.addr %s758, 2
      %s760 = smul.addr %s759, 8
      %s761 = scalar_lea.vmem %s9, %s760
      %p762 = scmp.lt.s32.totalorder %s23, 1
      %s763 = scalar_select %p762, %s23, 1
      %s764 = smul.addr %s763, 2
      %s765 = smul.addr %s764, 2
      %s766 = scalar_lea.vmem %s10, %s765
      %p767 = scmp.lt.s32.totalorder %s23, 1
      %s768 = scalar_select %p767, %s23, 1
      %s769 = smul.addr %s768, 2
      %s770 = smul.addr %s769, 2
      %s771 = scalar_lea.vmem %s11, %s770
      // Predicated region
      $region57: #{inception_block_forward.2} parent=55 // pred_check
        %p772 = pneg %p245
      $region58: #{inception_block_forward.2} parent=55 // pred_check_branch
        %774 = sbr.rel (%p772) target = $region60
      $region59: #{inception_block_forward.2} parent=55 // pred_region
        _
      $region60: #{inception_block_forward.2} parent=55 // pred_fallthru
        _
      // Predicated region
      $region61: #{inception_block_forward.2} parent=55 // pred_check
        %p775 = pneg %p271
      $region62: #{inception_block_forward.2} parent=55 // pred_check_branch
        %777 = sbr.rel (%p775) target = $region64
      $region63: #{inception_block_forward.2} parent=55 // pred_region
        _
      $region64: #{inception_block_forward.2} parent=55 // pred_fallthru
        _
      // Predicated region
      $region65: #{inception_block_forward.2} parent=55 // pred_check
        %p778 = pneg %p297
      $region66: #{inception_block_forward.2} parent=55 // pred_check_branch
        %780 = sbr.rel (%p778) target = $region68
      $region67: #{inception_block_forward.2} parent=55 // pred_region
        _
      $region68: #{inception_block_forward.2} parent=55 // pred_fallthru
        _
    $region56: #{inception_block_forward.2} parent=5 // pred_fallthru
      _
    %p781 = scmp.le.s32.totalorder 2, %s18
    // Predicated region
    $region69: #{inception_block_forward.2} parent=5 // pred_check
      %p782 = pneg %p781
    $region70: #{inception_block_forward.2} parent=5 // pred_check_branch
      %784 = sbr.rel (%p782) target = $region72
    $region71: #{inception_block_forward.2} parent=5 // pred_region
      %s785 = ssub.s32 %s18, 2
      // Predicated region
      $region73: #{inception_block_forward.2} parent=71 // pred_check
        %p786 = pneg %p251
      $region74: #{inception_block_forward.2} parent=71 // pred_check_branch
        %788 = sbr.rel (%p786) target = $region76
      $region75: #{inception_block_forward.2} parent=71 // pred_region
        %p789 = scmp.lt.s32.totalorder %s24, 1
        %s790 = scalar_select %p789, %s24, 1
        %s791 = smul.addr %s790, 2
        %s792 = smul.addr %s791, 8
        %s793 = scalar_lea.vmem %s9, %s792
      $region76: #{inception_block_forward.2} parent=71 // pred_fallthru
        _
      // Predicated region
      $region77: #{inception_block_forward.2} parent=71 // pred_check
        %p794 = pneg %p277
      $region78: #{inception_block_forward.2} parent=71 // pred_check_branch
        %796 = sbr.rel (%p794) target = $region80
      $region79: #{inception_block_forward.2} parent=71 // pred_region
        %p797 = scmp.lt.s32.totalorder %s24, 1
        %s798 = scalar_select %p797, %s24, 1
        %s799 = smul.addr %s798, 2
        %s800 = smul.addr %s799, 2
        %s801 = scalar_lea.vmem %s10, %s800
      $region80: #{inception_block_forward.2} parent=71 // pred_fallthru
        _
      // Predicated region
      $region81: #{inception_block_forward.2} parent=71 // pred_check
        %p802 = pneg %p303
      $region82: #{inception_block_forward.2} parent=71 // pred_check_branch
        %804 = sbr.rel (%p802) target = $region84
      $region83: #{inception_block_forward.2} parent=71 // pred_region
        %p805 = scmp.lt.s32.totalorder %s24, 1
        %s806 = scalar_select %p805, %s24, 1
        %s807 = smul.addr %s806, 2
        %s808 = smul.addr %s807, 2
        %s809 = scalar_lea.vmem %s11, %s808
      $region84: #{inception_block_forward.2} parent=71 // pred_fallthru
        _
    $region72: #{inception_block_forward.2} parent=5 // pred_fallthru
      _
  $region6: #{inception_block_forward.2} parent=0 // loop_footer
    %s22 = sadd.s32 1, %s18
  $region7: #{inception_block_forward.2} parent=0 // loop_footer_branch
    %17 = sbr.rel target = $region3
  $region8: #{inception_block_forward.2} parent=0 // loop_exit
    _

</llo_original>
